<compile_context>
chip_gen: v6e
topology: v6e:2x2x1
jax: 0.10.0
libtpu: 0.0.40
codegen_flags: <defaults>
</compile_context>

<pallas_src>
import jax
import jax.numpy as jnp
from jax import lax
from jax.experimental import pallas as pl
from jax.experimental.pallas import tpu as pltpu


def _round_up(n, m):
    return (n + m - 1) // m * m


def tcn_kernel(x_ref, m_ref, w_in_ref, b_in_ref, w3_ref, b3_ref,
               w1_ref, b1_ref, w_out_ref, b_out_ref, o_ref,
               pad_ref, stage_ref):
    T = x_ref.shape[1]
    F = w_in_ref.shape[-1]              # padded feature dim (multiple of 128)
    L = w1_ref.shape[0]                 # number of dilated residual layers
    PAD = (pad_ref.shape[0] - T) // 2   # halo rows each side (>= max dilation)
    mm_dtype = w_in_ref.dtype           # matmul compute dtype (f32 or bf16)

    x = x_ref[0]                        # (T, DIM)
    m = m_ref[0]                        # (T, 1) mask[:, 0:1, :], channels-last
    m_b = jnp.broadcast_to(m, (T, F))   # hoisted mask broadcast (reused each layer)

    # Zero the padded scratch; the (never written) halo provides Conv1d zero padding.
    pad_ref[...] = jnp.zeros_like(pad_ref)

    # conv_1x1: Conv1d(dim, F, 1)  ==  (T, dim) @ (dim, F) + b
    out = jnp.dot(x.astype(mm_dtype), w_in_ref[...],
                  preferred_element_type=jnp.float32) + b_in_ref[...]

    def layer(l, out):
        d = l + 1                                         # dilation of layer l
        pad_ref[pl.ds(PAD, T), :] = out                   # write activations once
        left = pad_ref[pl.ds(PAD - d, T), :]              # x[t - d]
        right = pad_ref[pl.ds(PAD + d, T), :]             # x[t + d]
        # Stage the three taps side by side -> a single fused matmul with K = 3F.
        stage_ref[:, 0:F] = left.astype(mm_dtype)
        stage_ref[:, F:2 * F] = out.astype(mm_dtype)
        stage_ref[:, 2 * F:3 * F] = right.astype(mm_dtype)
        h = jnp.dot(stage_ref[...], w3_ref[l],
                    preferred_element_type=jnp.float32) + b3_ref[l]
        h = jnp.maximum(h, 0.0)                           # ReLU
        h = jnp.dot(h.astype(mm_dtype), w1_ref[l],
                    preferred_element_type=jnp.float32) + b1_ref[l]
        return (h + out) * m_b                            # residual + mask

    out = lax.fori_loop(0, L, layer, out)

    # last_conv: Conv1d(F, num_classes, 1), then mask
    logits = jnp.dot(out.astype(mm_dtype), w_out_ref[...],
                     preferred_element_type=jnp.float32) + b_out_ref[...]
    o_ref[0] = (logits * m).astype(o_ref.dtype)


def tcn_forward(x_nct, mask_nct, params, *, matmul_dtype=jnp.float32):
    """x_nct: (B, dim, T), mask_nct: (B, *, T). Returns (B, num_classes, T)."""
    B, DIM, T = x_nct.shape
    F = params["w_in"].shape[1]
    C = params["w_out"].shape[1]
    L = params["w3"].shape[0]
    Fp = _round_up(F, 128)    # lane-dense feature dim
    Cp = _round_up(C, 128)    # lane-dense class dim -> dense output writeback
    PAD = _round_up(L, 8)     # halo >= max dilation, sublane-aligned center write

    x = jnp.transpose(x_nct, (0, 2, 1)).astype(jnp.float32)                # (B, T, DIM)
    m = jnp.transpose(mask_nct[:, 0:1, :], (0, 2, 1)).astype(jnp.float32)  # (B, T, 1)

    def zpad(a, axes_targets):
        pads = [(0, 0)] * a.ndim
        for ax, tgt in axes_targets:
            pads[ax] = (0, tgt - a.shape[ax])
        return jnp.pad(a, pads)

    # Zero-padding extra feature/class columns is exact: padded channels stay 0
    # through every layer and contribute nothing to the real channels.
    w_in = zpad(params["w_in"], [(-1, Fp)]).astype(matmul_dtype)              # (DIM, Fp)
    b_in = zpad(params["b_in"], [(-1, Fp)]).astype(jnp.float32)               # (1, Fp)
    w3 = zpad(params["w3"], [(-2, Fp), (-1, Fp)]).astype(matmul_dtype)        # (L, 3, Fp, Fp)
    w3 = w3.reshape(L, 3 * Fp, Fp)                                            # fused taps
    b3 = zpad(params["b3"], [(-1, Fp)]).astype(jnp.float32)                   # (L, 1, Fp)
    w1 = zpad(params["w1"], [(-2, Fp), (-1, Fp)]).astype(matmul_dtype)        # (L, Fp, Fp)
    b1 = zpad(params["b1"], [(-1, Fp)]).astype(jnp.float32)                   # (L, 1, Fp)
    w_out = zpad(params["w_out"], [(-2, Fp), (-1, Cp)]).astype(matmul_dtype)  # (Fp, Cp)
    b_out = zpad(params["b_out"], [(-1, Cp)]).astype(jnp.float32)             # (1, Cp)

    def rep_spec(shape):
        return pl.BlockSpec(shape, lambda b, _n=len(shape): (0,) * _n)

    out = pl.pallas_call(
        tcn_kernel,
        out_shape=jax.ShapeDtypeStruct((B, T, Cp), jnp.float32),
        grid=(B,),
        in_specs=[
            pl.BlockSpec((1, T, DIM), lambda b: (b, 0, 0)),   # x, one batch row per step
            pl.BlockSpec((1, T, 1), lambda b: (b, 0, 0)),     # mask
            rep_spec(w_in.shape), rep_spec(b_in.shape),
            rep_spec(w3.shape), rep_spec(b3.shape),
            rep_spec(w1.shape), rep_spec(b1.shape),
            rep_spec(w_out.shape), rep_spec(b_out.shape),
        ],
        out_specs=pl.BlockSpec((1, T, Cp), lambda b: (b, 0, 0)),
        scratch_shapes=[
            pltpu.VMEM((T + 2 * PAD, Fp), jnp.float32),   # zero-padded activations
            pltpu.VMEM((T, 3 * Fp), matmul_dtype),        # fused 3-tap staging
        ],
        compiler_params=pltpu.CompilerParams(
            dimension_semantics=("parallel",)),           # batch rows independent (v7x 2 TCs)
    )(x, m, w_in, b_in, w3, b3, w1, b1, w_out, b_out)

    # TODO(synk): for very long T on v7x (64 MiB VMEM), tile the T axis with an
    # L-row halo per layer (carried halo scratch) instead of holding all of T.
    return jnp.transpose(out[:, :, :C], (0, 2, 1))        # back to (B, num_classes, T)


def tcn_reference(x_nct, mask_nct, params):
    """Pure-JAX reference of the PyTorch forward (for verification)."""
    x = jnp.transpose(x_nct, (0, 2, 1)).astype(jnp.float32)
    m = jnp.transpose(mask_nct[:, 0:1, :], (0, 2, 1)).astype(jnp.float32)
    T = x.shape[1]
    out = jnp.einsum("btd,df->btf", x, params["w_in"]) + params["b_in"]
    L = params["w3"].shape[0]
    for l in range(L):
        d = l + 1
        inp = out
        pad = jnp.pad(inp, ((0, 0), (d, d), (0, 0)))
        x_m = pad[:, 0:T, :]
        x_c = pad[:, d:d + T, :]
        x_p = pad[:, 2 * d:2 * d + T, :]
        h = (jnp.einsum("btf,fg->btg", x_m, params["w3"][l, 0])
             + jnp.einsum("btf,fg->btg", x_c, params["w3"][l, 1])
             + jnp.einsum("btf,fg->btg", x_p, params["w3"][l, 2])
             + params["b3"][l])
        h = jnp.maximum(h, 0.0)
        h = jnp.einsum("btf,fg->btg", h, params["w1"][l]) + params["b1"][l]
        out = (h + inp) * m
    logits = jnp.einsum("btf,fc->btc", out, params["w_out"]) + params["b_out"]
    return jnp.transpose(logits * m, (0, 2, 1))


def init_params(key, num_layers, num_f_maps, dim, num_classes):
    ks = jax.random.split(key, 10)
    s = 0.1
    return {
        # conv_1x1: Conv1d(dim, F, 1) -> weight stored (dim, F), bias (1, F)
        "w_in": s * jax.random.normal(ks[0], (dim, num_f_maps), jnp.float32),
        "b_in": s * jax.random.normal(ks[1], (1, num_f_maps), jnp.float32),
        # per-layer dilated conv3: (L, 3, F, F) with tap order [t-d, t, t+d]; bias (L, 1, F)
        "w3": s * jax.random.normal(ks[2], (num_layers, 3, num_f_maps, num_f_maps), jnp.float32),
        "b3": s * jax.random.normal(ks[3], (num_layers, 1, num_f_maps), jnp.float32),
        # per-layer conv 1x1: (L, F, F), bias (L, 1, F)
        "w1": s * jax.random.normal(ks[4], (num_layers, num_f_maps, num_f_maps), jnp.float32),
        "b1": s * jax.random.normal(ks[5], (num_layers, 1, num_f_maps), jnp.float32),
        # last_conv: Conv1d(F, num_classes, 1)
        "w_out": s * jax.random.normal(ks[6], (num_f_maps, num_classes), jnp.float32),
        "b_out": s * jax.random.normal(ks[7], (1, num_classes), jnp.float32),
    }


if __name__ == "__main__":
    # small shapes consistent with TCN(num_layers, num_f_maps, dim, num_classes)
    B, T = 2, 16
    NUM_LAYERS, NUM_F_MAPS, DIM, NUM_CLASSES = 4, 16, 32, 8

    key = jax.random.PRNGKey(0)
    kx, km, kp = jax.random.split(key, 3)
    x = jax.random.normal(kx, (B, DIM, T), jnp.float32)                      # (N, C, T) like PyTorch
    mask = (jax.random.uniform(km, (B, NUM_CLASSES, T)) > 0.3).astype(jnp.float32)
    params = init_params(kp, NUM_LAYERS, NUM_F_MAPS, DIM, NUM_CLASSES)

    out = tcn_forward(x, mask, params)          # f32 matmuls (use jnp.bfloat16 on v6e/v7x)
    out = jax.block_until_ready(out)

    ref = tcn_reference(x, mask, params)
    assert out.shape == (B, NUM_CLASSES, T), out.shape
    assert jnp.allclose(out, ref, atol=2e-3, rtol=2e-3), float(jnp.max(jnp.abs(out - ref)))

    print("KERNEL_OK")
</pallas_src>

<mosaic_0001>
module attributes {stable_mosaic.version = 11 : i64} {
  func.func @tcn_kernel(%arg0: i32, %arg1: memref<1x16x32xf32, #tpu.memory_space<vmem>>, %arg2: memref<1x16x1xf32, #tpu.memory_space<vmem>>, %arg3: memref<32x128xf32, #tpu.memory_space<vmem>>, %arg4: memref<1x128xf32, #tpu.memory_space<vmem>>, %arg5: memref<4x384x128xf32, #tpu.memory_space<vmem>>, %arg6: memref<4x1x128xf32, #tpu.memory_space<vmem>>, %arg7: memref<4x128x128xf32, #tpu.memory_space<vmem>>, %arg8: memref<4x1x128xf32, #tpu.memory_space<vmem>>, %arg9: memref<128x128xf32, #tpu.memory_space<vmem>>, %arg10: memref<1x128xf32, #tpu.memory_space<vmem>>, %arg11: memref<1x16x128xf32, #tpu.memory_space<vmem>>, %arg12: memref<32x128xf32, #tpu.memory_space<vmem>>, %arg13: memref<16x384xf32, #tpu.memory_space<vmem>>) attributes {dimension_semantics = [#tpu.dimension_semantics<parallel>], iteration_bounds = array<i64: 2>, scalar_prefetch = 0 : i64, scratch_operands = 2 : i64, tpu.core_type = #tpu.core_type<tc>, window_params = [{transform_indices = @transform_0, window_bounds = array<i64: 1, 16, 32>}, {transform_indices = @transform_1, window_bounds = array<i64: 1, 16, 1>}, {pipeline_mode = #tpu.pipeline_mode<synchronous>, transform_indices = @transform_2, window_bounds = array<i64: 32, 128>}, {pipeline_mode = #tpu.pipeline_mode<synchronous>, transform_indices = @transform_3, window_bounds = array<i64: 1, 128>}, {pipeline_mode = #tpu.pipeline_mode<synchronous>, transform_indices = @transform_4, window_bounds = array<i64: 4, 384, 128>}, {pipeline_mode = #tpu.pipeline_mode<synchronous>, transform_indices = @transform_5, window_bounds = array<i64: 4, 1, 128>}, {pipeline_mode = #tpu.pipeline_mode<synchronous>, transform_indices = @transform_6, window_bounds = array<i64: 4, 128, 128>}, {pipeline_mode = #tpu.pipeline_mode<synchronous>, transform_indices = @transform_7, window_bounds = array<i64: 4, 1, 128>}, {pipeline_mode = #tpu.pipeline_mode<synchronous>, transform_indices = @transform_8, window_bounds = array<i64: 128, 128>}, {pipeline_mode = #tpu.pipeline_mode<synchronous>, transform_indices = @transform_9, window_bounds = array<i64: 1, 128>}, {transform_indices = @transform_10, window_bounds = array<i64: 1, 16, 128>}]} {
    %c0 = arith.constant 0 : index
    %c0_0 = arith.constant 0 : index
    %c0_1 = arith.constant 0 : index
    %0 = vector.load %arg1[%c0, %c0_0, %c0_1] : memref<1x16x32xf32, #tpu.memory_space<vmem>>, vector<1x16x32xf32>
    %1 = vector.shape_cast %0 : vector<1x16x32xf32> to vector<16x32xf32>
    %c0_2 = arith.constant 0 : index
    %c0_3 = arith.constant 0 : index
    %c0_4 = arith.constant 0 : index
    %2 = vector.load %arg2[%c0_2, %c0_3, %c0_4] : memref<1x16x1xf32, #tpu.memory_space<vmem>>, vector<1x16x1xf32>
    %3 = vector.shape_cast %2 : vector<1x16x1xf32> to vector<16x1xf32>
    %4 = vector.shape_cast %3 : vector<16x1xf32> to vector<16x1xf32>
    %5 = vector.broadcast %4 : vector<16x1xf32> to vector<16x128xf32>
    %cst = arith.constant 0.000000e+00 : f32
    %6 = vector.broadcast %cst : f32 to vector<32x128xf32>
    %c0_5 = arith.constant 0 : index
    %c0_6 = arith.constant 0 : index
    %7 = vector.load %arg12[%c0_5, %c0_6] : memref<32x128xf32, #tpu.memory_space<vmem>>, vector<32x128xf32>
    tpu.vector_store %arg12[%c0_5, %c0_6], %6 {strides = array<i32>} : memref<32x128xf32, #tpu.memory_space<vmem>>, vector<32x128xf32>,
    %c0_7 = arith.constant 0 : index
    %c0_8 = arith.constant 0 : index
    %8 = vector.load %arg3[%c0_7, %c0_8] : memref<32x128xf32, #tpu.memory_space<vmem>>, vector<32x128xf32>
    %cst_9 = arith.constant dense<0.000000e+00> : vector<16x128xf32>
    %9 = tpu.matmul %1, %8, %cst_9 {dimension_numbers = #tpu.dot_dimension_numbers<[1], [0], [0], [1], [0, 0, 1, 1], [], []>} : vector<16x32xf32>, vector<32x128xf32>, vector<16x128xf32> -> vector<16x128xf32>
    %c0_10 = arith.constant 0 : index
    %c0_11 = arith.constant 0 : index
    %10 = vector.load %arg4[%c0_10, %c0_11] : memref<1x128xf32, #tpu.memory_space<vmem>>, vector<1x128xf32>
    %11 = vector.broadcast %10 : vector<1x128xf32> to vector<16x128xf32>
    %12 = arith.addf %9, %11 : vector<16x128xf32>
    %c0_i32 = arith.constant 0 : i32
    %c4_i32 = arith.constant 4 : i32
    %13 = arith.addi %c0_i32, %c4_i32 : i32
    %c1_i32 = arith.constant 1 : i32
    %14 = scf.for %arg14 = %c0_i32 to %13 step %c1_i32 iter_args(%arg15 = %12) -> (vector<16x128xf32>)  : i32 {
      %c1_i32_21 = arith.constant 1 : i32
      %25 = arith.addi %arg14, %c1_i32_21 : i32
      %c8 = arith.constant 8 : index
      %c0_22 = arith.constant 0 : index
      %26 = vector.load %arg12[%c8, %c0_22] : memref<32x128xf32, #tpu.memory_space<vmem>>, vector<16x128xf32>
      tpu.vector_store %arg12[%c8, %c0_22], %arg15 {strides = array<i32>} : memref<32x128xf32, #tpu.memory_space<vmem>>, vector<16x128xf32>,
      %c8_i32 = arith.constant 8 : i32
      %27 = arith.subi %c8_i32, %25 : i32
      %28 = arith.index_cast %27 : i32 to index
      %c0_23 = arith.constant 0 : index
      %29 = vector.load %arg12[%28, %c0_23] : memref<32x128xf32, #tpu.memory_space<vmem>>, vector<16x128xf32>
      %c8_i32_24 = arith.constant 8 : i32
      %30 = arith.addi %c8_i32_24, %25 : i32
      %31 = arith.index_cast %30 : i32 to index
      %c0_25 = arith.constant 0 : index
      %32 = vector.load %arg12[%31, %c0_25] : memref<32x128xf32, #tpu.memory_space<vmem>>, vector<16x128xf32>
      %c0_26 = arith.constant 0 : index
      %c0_27 = arith.constant 0 : index
      %33 = vector.load %arg13[%c0_26, %c0_27] : memref<16x384xf32, #tpu.memory_space<vmem>>, vector<16x128xf32>
      tpu.vector_store %arg13[%c0_26, %c0_27], %29 {strides = array<i32>} : memref<16x384xf32, #tpu.memory_space<vmem>>, vector<16x128xf32>,
      %c0_28 = arith.constant 0 : index
      %c128 = arith.constant 128 : index
      %34 = vector.load %arg13[%c0_28, %c128] : memref<16x384xf32, #tpu.memory_space<vmem>>, vector<16x128xf32>
      tpu.vector_store %arg13[%c0_28, %c128], %arg15 {strides = array<i32>} : memref<16x384xf32, #tpu.memory_space<vmem>>, vector<16x128xf32>,
      %c0_29 = arith.constant 0 : index
      %c256 = arith.constant 256 : index
      %35 = vector.load %arg13[%c0_29, %c256] : memref<16x384xf32, #tpu.memory_space<vmem>>, vector<16x128xf32>
      tpu.vector_store %arg13[%c0_29, %c256], %32 {strides = array<i32>} : memref<16x384xf32, #tpu.memory_space<vmem>>, vector<16x128xf32>,
      %c0_30 = arith.constant 0 : index
      %c0_31 = arith.constant 0 : index
      %36 = vector.load %arg13[%c0_30, %c0_31] : memref<16x384xf32, #tpu.memory_space<vmem>>, vector<16x384xf32>
      %37 = arith.index_cast %arg14 : i32 to index
      %c0_32 = arith.constant 0 : index
      %c0_33 = arith.constant 0 : index
      %38 = vector.load %arg5[%37, %c0_32, %c0_33] : memref<4x384x128xf32, #tpu.memory_space<vmem>>, vector<1x384x128xf32>
      %39 = vector.shape_cast %38 : vector<1x384x128xf32> to vector<384x128xf32>
      %cst_34 = arith.constant dense<0.000000e+00> : vector<16x128xf32>
      %40 = tpu.matmul %36, %39, %cst_34 {dimension_numbers = #tpu.dot_dimension_numbers<[1], [0], [0], [1], [0, 0, 1, 1], [], []>} : vector<16x384xf32>, vector<384x128xf32>, vector<16x128xf32> -> vector<16x128xf32>
      %41 = arith.index_cast %arg14 : i32 to index
      %c0_35 = arith.constant 0 : index
      %c0_36 = arith.constant 0 : index
      %42 = vector.load %arg6[%41, %c0_35, %c0_36] : memref<4x1x128xf32, #tpu.memory_space<vmem>>, vector<1x1x128xf32>
      %43 = vector.shape_cast %42 : vector<1x1x128xf32> to vector<1x128xf32>
      %44 = vector.broadcast %43 : vector<1x128xf32> to vector<16x128xf32>
      %45 = arith.addf %40, %44 : vector<16x128xf32>
      %cst_37 = arith.constant 0.000000e+00 : f32
      %46 = vector.broadcast %cst_37 : f32 to vector<16x128xf32>
      %47 = arith.maximumf %45, %46 : vector<16x128xf32>
      %48 = arith.index_cast %arg14 : i32 to index
      %c0_38 = arith.constant 0 : index
      %c0_39 = arith.constant 0 : index
      %49 = vector.load %arg7[%48, %c0_38, %c0_39] : memref<4x128x128xf32, #tpu.memory_space<vmem>>, vector<1x128x128xf32>
      %50 = vector.shape_cast %49 : vector<1x128x128xf32> to vector<128x128xf32>
      %cst_40 = arith.constant dense<0.000000e+00> : vector<16x128xf32>
      %51 = tpu.matmul %47, %50, %cst_40 {dimension_numbers = #tpu.dot_dimension_numbers<[1], [0], [0], [1], [0, 0, 1, 1], [], []>} : vector<16x128xf32>, vector<128x128xf32>, vector<16x128xf32> -> vector<16x128xf32>
      %52 = arith.index_cast %arg14 : i32 to index
      %c0_41 = arith.constant 0 : index
      %c0_42 = arith.constant 0 : index
      %53 = vector.load %arg8[%52, %c0_41, %c0_42] : memref<4x1x128xf32, #tpu.memory_space<vmem>>, vector<1x1x128xf32>
      %54 = vector.shape_cast %53 : vector<1x1x128xf32> to vector<1x128xf32>
      %55 = vector.broadcast %54 : vector<1x128xf32> to vector<16x128xf32>
      %56 = arith.addf %51, %55 : vector<16x128xf32>
      %57 = arith.addf %56, %arg15 : vector<16x128xf32>
      %58 = arith.mulf %57, %5 : vector<16x128xf32>
      scf.yield %58 : vector<16x128xf32>
    }
    %c4_i32_12 = arith.constant 4 : i32
    %c0_13 = arith.constant 0 : index
    %c0_14 = arith.constant 0 : index
    %15 = vector.load %arg9[%c0_13, %c0_14] : memref<128x128xf32, #tpu.memory_space<vmem>>, vector<128x128xf32>
    %cst_15 = arith.constant dense<0.000000e+00> : vector<16x128xf32>
    %16 = tpu.matmul %14, %15, %cst_15 {dimension_numbers = #tpu.dot_dimension_numbers<[1], [0], [0], [1], [0, 0, 1, 1], [], []>} : vector<16x128xf32>, vector<128x128xf32>, vector<16x128xf32> -> vector<16x128xf32>
    %c0_16 = arith.constant 0 : index
    %c0_17 = arith.constant 0 : index
    %17 = vector.load %arg10[%c0_16, %c0_17] : memref<1x128xf32, #tpu.memory_space<vmem>>, vector<1x128xf32>
    %18 = vector.broadcast %17 : vector<1x128xf32> to vector<16x128xf32>
    %19 = arith.addf %16, %18 : vector<16x128xf32>
    %20 = vector.broadcast %3 : vector<16x1xf32> to vector<16x128xf32>
    %21 = arith.mulf %19, %20 : vector<16x128xf32>
    %c0_18 = arith.constant 0 : index
    %c0_19 = arith.constant 0 : index
    %c0_20 = arith.constant 0 : index
    %22 = vector.load %arg11[%c0_18, %c0_19, %c0_20] : memref<1x16x128xf32, #tpu.memory_space<vmem>>, vector<1x16x128xf32>
    %23 = vector.shape_cast %22 : vector<1x16x128xf32> to vector<16x128xf32>
    %24 = vector.shape_cast %21 : vector<16x128xf32> to vector<1x16x128xf32>
    tpu.vector_store %arg11[%c0_18, %c0_19, %c0_20], %24 {strides = array<i32>} : memref<1x16x128xf32, #tpu.memory_space<vmem>>, vector<1x16x128xf32>,
    return
  }
  func.func @transform_0(%arg0: i32) -> (i32, i32, i32) {
    %c0_i32 = arith.constant 0 : i32
    %c0_i32_0 = arith.constant 0 : i32
    %c0_i32_1 = arith.constant 0 : i32
    return %arg0, %c0_i32, %c0_i32_0 : i32, i32, i32
  }
  func.func @transform_1(%arg0: i32) -> (i32, i32, i32) {
    %c0_i32 = arith.constant 0 : i32
    %c0_i32_0 = arith.constant 0 : i32
    %c0_i32_1 = arith.constant 0 : i32
    return %arg0, %c0_i32, %c0_i32_0 : i32, i32, i32
  }
  func.func @transform_2(%arg0: i32) -> (i32, i32) {
    %c0_i32 = arith.constant 0 : i32
    %c0_i32_0 = arith.constant 0 : i32
    %c0_i32_1 = arith.constant 0 : i32
    return %c0_i32, %c0_i32_0 : i32, i32
  }
  func.func @transform_3(%arg0: i32) -> (i32, i32) {
    %c0_i32 = arith.constant 0 : i32
    %c0_i32_0 = arith.constant 0 : i32
    %c0_i32_1 = arith.constant 0 : i32
    return %c0_i32, %c0_i32_0 : i32, i32
  }
  func.func @transform_4(%arg0: i32) -> (i32, i32, i32) {
    %c0_i32 = arith.constant 0 : i32
    %c0_i32_0 = arith.constant 0 : i32
    %c0_i32_1 = arith.constant 0 : i32
    %c0_i32_2 = arith.constant 0 : i32
    return %c0_i32, %c0_i32_0, %c0_i32_1 : i32, i32, i32
  }
  func.func @transform_5(%arg0: i32) -> (i32, i32, i32) {
    %c0_i32 = arith.constant 0 : i32
    %c0_i32_0 = arith.constant 0 : i32
    %c0_i32_1 = arith.constant 0 : i32
    %c0_i32_2 = arith.constant 0 : i32
    return %c0_i32, %c0_i32_0, %c0_i32_1 : i32, i32, i32
  }
  func.func @transform_6(%arg0: i32) -> (i32, i32, i32) {
    %c0_i32 = arith.constant 0 : i32
    %c0_i32_0 = arith.constant 0 : i32
    %c0_i32_1 = arith.constant 0 : i32
    %c0_i32_2 = arith.constant 0 : i32
    return %c0_i32, %c0_i32_0, %c0_i32_1 : i32, i32, i32
  }
  func.func @transform_7(%arg0: i32) -> (i32, i32, i32) {
    %c0_i32 = arith.constant 0 : i32
    %c0_i32_0 = arith.constant 0 : i32
    %c0_i32_1 = arith.constant 0 : i32
    %c0_i32_2 = arith.constant 0 : i32
    return %c0_i32, %c0_i32_0, %c0_i32_1 : i32, i32, i32
  }
  func.func @transform_8(%arg0: i32) -> (i32, i32) {
    %c0_i32 = arith.constant 0 : i32
    %c0_i32_0 = arith.constant 0 : i32
    %c0_i32_1 = arith.constant 0 : i32
    return %c0_i32, %c0_i32_0 : i32, i32
  }
  func.func @transform_9(%arg0: i32) -> (i32, i32) {
    %c0_i32 = arith.constant 0 : i32
    %c0_i32_0 = arith.constant 0 : i32
    %c0_i32_1 = arith.constant 0 : i32
    return %c0_i32, %c0_i32_0 : i32, i32
  }
  func.func @transform_10(%arg0: i32) -> (i32, i32, i32) {
    %c0_i32 = arith.constant 0 : i32
    %c0_i32_0 = arith.constant 0 : i32
    %c0_i32_1 = arith.constant 0 : i32
    return %arg0, %c0_i32, %c0_i32_0 : i32, i32, i32
  }
}

</mosaic_0001>

<llo_original>
// kernel: tpu_custom_call.1
$region0: #{tpu_custom_call.1}
  #allocation0 [shape = 'u32[]', space=smem, size = 0x4, offset = 0x4, fixed_abs, tag = 'smem constant byte address 0x4 - core index']
  #allocation1 [shape = 'u32[144,128]{1,0:T(1,128)}', space=vmem, size = 0x12000, scoped, tag = 'internal scratch']
  #allocation2 [shape = 'f32[32,128]{1,0:T(8,128)}', space=vmem, size = 0x4000, scoped, tag = 'scratch operand']
  #allocation3 [shape = 'f32[16,384]{1,0:T(8,128)}', space=vmem, size = 0x6000, scoped, tag = 'scratch operand']
  %s0 = inlined_call_operand.vmem [shape: f32[2,16,32], index: 0, kind: input, shape index: {}]
  %s1 = inlined_call_operand.vmem [shape: f32[2,16,1], index: 1, kind: input, shape index: {}]
  %s2 = inlined_call_operand.hbm [shape: f32[32,128], index: 2, kind: input, shape index: {}]
  %s3 = inlined_call_operand.vmem [shape: f32[1,128], index: 3, kind: input, shape index: {}]
  %s4 = inlined_call_operand.hbm [shape: f32[4,384,128], index: 4, kind: input, shape index: {}]
  %s5 = inlined_call_operand.vmem [shape: f32[4,1,128], index: 5, kind: input, shape index: {}]
  %s6 = inlined_call_operand.hbm [shape: f32[4,128,128], index: 6, kind: input, shape index: {}]
  %s7 = inlined_call_operand.vmem [shape: f32[4,1,128], index: 7, kind: input, shape index: {}]
  %s8 = inlined_call_operand.hbm [shape: f32[128,128], index: 8, kind: input, shape index: {}]
  %s9 = inlined_call_operand.vmem [shape: f32[1,128], index: 9, kind: input, shape index: {}]
  %s10 = inlined_call_operand.hbm [shape: f32[2,16,128], index: 10, kind: output, shape index: {}]
  %s11 = sld [smem:[#allocation0]]
  $region96: #{tpu_custom_call.1} parent=0
    _
  %s13 = ssub.s32 1, %s11
  %s14 = scalar_select 0, %s13, %s11
  $region1: #{tpu_custom_call.1} parent=0
    #allocation4 [shape = 'u8[16384]{0}', space=vmem, size = 0x4000, scoped, tag = 'input window, operand 2, single buffered']
    #allocation5 [shape = 's32[2]{0}', space=sflag, size = 0x8, scoped, tag = 'scoped memory for tpu_custom_call.1']
    #allocation6 [shape = 's32[2]{0}', space=sflag, size = 0x8, scoped, tag = 'scoped memory for tpu_custom_call.1']
    #allocation7 [shape = 'u8[786432]{0}', space=vmem, size = 0xc0000, scoped, tag = 'input window, operand 4, single buffered']
    #allocation8 [shape = 's32[1]{0}', space=sflag, size = 0x4, scoped, tag = 'scoped memory for tpu_custom_call.1']
    #allocation9 [shape = 'u8[262144]{0}', space=vmem, size = 0x40000, scoped, tag = 'input window, operand 6, single buffered']
    #allocation10 [shape = 'u8[65536]{0}', space=vmem, size = 0x10000, scoped, tag = 'input window, operand 8, single buffered']
    #allocation11 [shape = 's32[1]{0}', space=sflag, size = 0x4, scoped, tag = 'scoped memory for tpu_custom_call.1']
    #allocation12 [shape = 'u8[16384]{0}', space=vmem, size = 0x4000, scoped, tag = 'output window, operand 0']
    %15 = vsyncpa [#allocation5], 0
    %16 = vsyncpa [#allocation8], 0
    %17 = vsyncpa [#allocation11], 0
    %18 = vsyncpa [#allocation6], 0
    %s19 = scalar_lea.sflag [#allocation6], 1
    %20 = vsyncpa %s19, 0
    loop: start=0, step=1, limit=4
    $region2: #{tpu_custom_call.1} parent=1 // loop_pre_header
      _
    $region3: #{tpu_custom_call.1} parent=1 // loop_header
      %s22 = sphi 0, %s26
      %p23 = scmp.ge.s32.totalorder %s22, 4
      %s32 = sphi 0, %s34
      %s35 = sphi 0, %s32
      %s36 = sphi 0, %s35
      %s52 = sphi 0, %s36
      %s58 = sphi 0, %s60
      %s61 = sphi 0, %s58
      %s62 = sphi 0, %s61
      %s78 = sphi 0, %s62
      %s82 = sphi 0, %s82
      %s84 = sphi 0, %s82
      %s85 = sphi 0, %s84
      %s99 = sphi 0, %s85
      %s103 = sphi 0, %s103
      %s105 = sphi 0, %s103
      %s106 = sphi 0, %s105
      %s120 = sphi 0, %s106
      %s124 = sphi 0, %s124
      %s126 = sphi 0, %s124
      %s127 = sphi 0, %s126
      %s141 = sphi 0, %s127
      %s145 = sphi 0, %s145
      %s147 = sphi 0, %s145
      %s148 = sphi 0, %s147
      %s162 = sphi 0, %s148
      %s166 = sphi 0, %s166
      %s168 = sphi 0, %s166
      %s169 = sphi 0, %s168
      %s183 = sphi 0, %s169
      %s187 = sphi 0, %s187
      %s189 = sphi 0, %s187
      %s190 = sphi 0, %s189
      %s204 = sphi 0, %s190
      %s208 = sphi 0, %s208
      %s210 = sphi 0, %s208
      %s211 = sphi 0, %s210
      %s225 = sphi 0, %s211
      %s229 = sphi 0, %s229
      %s231 = sphi 0, %s229
      %s232 = sphi 0, %s231
      %s246 = sphi 0, %s232
      %s252 = sphi 0, %s254
      %s255 = sphi 0, %s252
      %s256 = sphi 0, %s255
      %s272 = sphi 0, %s256
    $region4: #{tpu_custom_call.1} parent=1 // loop_header_branch
      %25 = sbr.rel (%p23) target = $region8
    $region5: #{tpu_custom_call.1} parent=1 // loop_body
      %s27 = ssub.s32 %s22, 1
      %s28 = ssub.s32 %s22, 2
      %s29 = sadd.s32 %s22, 1
      %s30 = ssub.s32 %s22, %s29
      %p31 = scmp.eq.s32.totalorder %s30, 0
      %s33 = sadd.s32 %s32, 1
      %s34 = scalar_select %p31, %s32, %s33
      %p37 = pneg %p31
      %p38 = scmp.eq.s32.totalorder %s22, 1
      %p39 = por %p37, %p38
      %p40 = scmp.ne.s32.totalorder %s32, %s35
      %p41 = scmp.eq.s32.totalorder %s22, 0
      %p42 = por %p40, %p41
      %p43 = scmp.ne.s32.totalorder %s32, %s35
      %p44 = scmp.eq.s32.totalorder %s27, 1
      %p45 = por %p43, %p44
      %p46 = scmp.ne.s32.totalorder %s35, %s36
      %p47 = scmp.eq.s32.totalorder %s27, 0
      %p48 = por %p46, %p47
      %p49 = scmp.ne.s32.totalorder %s35, %s36
      %p50 = scmp.eq.s32.totalorder %s28, 1
      %p51 = por %p49, %p50
      %p53 = scmp.ne.s32.totalorder %s36, %s52
      %p54 = scmp.eq.s32.totalorder %s28, 0
      %p55 = por %p53, %p54
      %s56 = ssub.s32 %s22, %s29
      %p57 = scmp.eq.s32.totalorder %s56, 0
      %s59 = sadd.s32 %s58, 1
      %s60 = scalar_select %p57, %s58, %s59
      %p63 = pneg %p57
      %p64 = scmp.eq.s32.totalorder %s22, 1
      %p65 = por %p63, %p64
      %p66 = scmp.ne.s32.totalorder %s58, %s61
      %p67 = scmp.eq.s32.totalorder %s22, 0
      %p68 = por %p66, %p67
      %p69 = scmp.ne.s32.totalorder %s58, %s61
      %p70 = scmp.eq.s32.totalorder %s27, 1
      %p71 = por %p69, %p70
      %p72 = scmp.ne.s32.totalorder %s61, %s62
      %p73 = scmp.eq.s32.totalorder %s27, 0
      %p74 = por %p72, %p73
      %p75 = scmp.ne.s32.totalorder %s61, %s62
      %p76 = scmp.eq.s32.totalorder %s28, 1
      %p77 = por %p75, %p76
      %p79 = scmp.ne.s32.totalorder %s62, %s78
      %p80 = scmp.eq.s32.totalorder %s28, 0
      %p81 = por %p79, %p80
      %s83 = sadd.s32 %s82, 1
      %p86 = scmp.eq.s32.totalorder %s22, 1
      %p87 = scmp.ne.s32.totalorder %s82, %s84
      %p88 = scmp.eq.s32.totalorder %s22, 0
      %p89 = por %p87, %p88
      %p90 = scmp.ne.s32.totalorder %s82, %s84
      %p91 = scmp.eq.s32.totalorder %s27, 1
      %p92 = por %p90, %p91
      %p93 = scmp.ne.s32.totalorder %s84, %s85
      %p94 = scmp.eq.s32.totalorder %s27, 0
      %p95 = por %p93, %p94
      %p96 = scmp.ne.s32.totalorder %s84, %s85
      %p97 = scmp.eq.s32.totalorder %s28, 1
      %p98 = por %p96, %p97
      %p100 = scmp.ne.s32.totalorder %s85, %s99
      %p101 = scmp.eq.s32.totalorder %s28, 0
      %p102 = por %p100, %p101
      %s104 = sadd.s32 %s103, 1
      %p107 = scmp.eq.s32.totalorder %s22, 1
      %p108 = scmp.ne.s32.totalorder %s103, %s105
      %p109 = scmp.eq.s32.totalorder %s22, 0
      %p110 = por %p108, %p109
      %p111 = scmp.ne.s32.totalorder %s103, %s105
      %p112 = scmp.eq.s32.totalorder %s27, 1
      %p113 = por %p111, %p112
      %p114 = scmp.ne.s32.totalorder %s105, %s106
      %p115 = scmp.eq.s32.totalorder %s27, 0
      %p116 = por %p114, %p115
      %p117 = scmp.ne.s32.totalorder %s105, %s106
      %p118 = scmp.eq.s32.totalorder %s28, 1
      %p119 = por %p117, %p118
      %p121 = scmp.ne.s32.totalorder %s106, %s120
      %p122 = scmp.eq.s32.totalorder %s28, 0
      %p123 = por %p121, %p122
      %s125 = sadd.s32 %s124, 1
      %p128 = scmp.eq.s32.totalorder %s22, 1
      %p129 = scmp.ne.s32.totalorder %s124, %s126
      %p130 = scmp.eq.s32.totalorder %s22, 0
      %p131 = por %p129, %p130
      %p132 = scmp.ne.s32.totalorder %s124, %s126
      %p133 = scmp.eq.s32.totalorder %s27, 1
      %p134 = por %p132, %p133
      %p135 = scmp.ne.s32.totalorder %s126, %s127
      %p136 = scmp.eq.s32.totalorder %s27, 0
      %p137 = por %p135, %p136
      %p138 = scmp.ne.s32.totalorder %s126, %s127
      %p139 = scmp.eq.s32.totalorder %s28, 1
      %p140 = por %p138, %p139
      %p142 = scmp.ne.s32.totalorder %s127, %s141
      %p143 = scmp.eq.s32.totalorder %s28, 0
      %p144 = por %p142, %p143
      %s146 = sadd.s32 %s145, 1
      %p149 = scmp.eq.s32.totalorder %s22, 1
      %p150 = scmp.ne.s32.totalorder %s145, %s147
      %p151 = scmp.eq.s32.totalorder %s22, 0
      %p152 = por %p150, %p151
      %p153 = scmp.ne.s32.totalorder %s145, %s147
      %p154 = scmp.eq.s32.totalorder %s27, 1
      %p155 = por %p153, %p154
      %p156 = scmp.ne.s32.totalorder %s147, %s148
      %p157 = scmp.eq.s32.totalorder %s27, 0
      %p158 = por %p156, %p157
      %p159 = scmp.ne.s32.totalorder %s147, %s148
      %p160 = scmp.eq.s32.totalorder %s28, 1
      %p161 = por %p159, %p160
      %p163 = scmp.ne.s32.totalorder %s148, %s162
      %p164 = scmp.eq.s32.totalorder %s28, 0
      %p165 = por %p163, %p164
      %s167 = sadd.s32 %s166, 1
      %p170 = scmp.eq.s32.totalorder %s22, 1
      %p171 = scmp.ne.s32.totalorder %s166, %s168
      %p172 = scmp.eq.s32.totalorder %s22, 0
      %p173 = por %p171, %p172
      %p174 = scmp.ne.s32.totalorder %s166, %s168
      %p175 = scmp.eq.s32.totalorder %s27, 1
      %p176 = por %p174, %p175
      %p177 = scmp.ne.s32.totalorder %s168, %s169
      %p178 = scmp.eq.s32.totalorder %s27, 0
      %p179 = por %p177, %p178
      %p180 = scmp.ne.s32.totalorder %s168, %s169
      %p181 = scmp.eq.s32.totalorder %s28, 1
      %p182 = por %p180, %p181
      %p184 = scmp.ne.s32.totalorder %s169, %s183
      %p185 = scmp.eq.s32.totalorder %s28, 0
      %p186 = por %p184, %p185
      %s188 = sadd.s32 %s187, 1
      %p191 = scmp.eq.s32.totalorder %s22, 1
      %p192 = scmp.ne.s32.totalorder %s187, %s189
      %p193 = scmp.eq.s32.totalorder %s22, 0
      %p194 = por %p192, %p193
      %p195 = scmp.ne.s32.totalorder %s187, %s189
      %p196 = scmp.eq.s32.totalorder %s27, 1
      %p197 = por %p195, %p196
      %p198 = scmp.ne.s32.totalorder %s189, %s190
      %p199 = scmp.eq.s32.totalorder %s27, 0
      %p200 = por %p198, %p199
      %p201 = scmp.ne.s32.totalorder %s189, %s190
      %p202 = scmp.eq.s32.totalorder %s28, 1
      %p203 = por %p201, %p202
      %p205 = scmp.ne.s32.totalorder %s190, %s204
      %p206 = scmp.eq.s32.totalorder %s28, 0
      %p207 = por %p205, %p206
      %s209 = sadd.s32 %s208, 1
      %p212 = scmp.eq.s32.totalorder %s22, 1
      %p213 = scmp.ne.s32.totalorder %s208, %s210
      %p214 = scmp.eq.s32.totalorder %s22, 0
      %p215 = por %p213, %p214
      %p216 = scmp.ne.s32.totalorder %s208, %s210
      %p217 = scmp.eq.s32.totalorder %s27, 1
      %p218 = por %p216, %p217
      %p219 = scmp.ne.s32.totalorder %s210, %s211
      %p220 = scmp.eq.s32.totalorder %s27, 0
      %p221 = por %p219, %p220
      %p222 = scmp.ne.s32.totalorder %s210, %s211
      %p223 = scmp.eq.s32.totalorder %s28, 1
      %p224 = por %p222, %p223
      %p226 = scmp.ne.s32.totalorder %s211, %s225
      %p227 = scmp.eq.s32.totalorder %s28, 0
      %p228 = por %p226, %p227
      %s230 = sadd.s32 %s229, 1
      %p233 = scmp.eq.s32.totalorder %s22, 1
      %p234 = scmp.ne.s32.totalorder %s229, %s231
      %p235 = scmp.eq.s32.totalorder %s22, 0
      %p236 = por %p234, %p235
      %p237 = scmp.ne.s32.totalorder %s229, %s231
      %p238 = scmp.eq.s32.totalorder %s27, 1
      %p239 = por %p237, %p238
      %p240 = scmp.ne.s32.totalorder %s231, %s232
      %p241 = scmp.eq.s32.totalorder %s27, 0
      %p242 = por %p240, %p241
      %p243 = scmp.ne.s32.totalorder %s231, %s232
      %p244 = scmp.eq.s32.totalorder %s28, 1
      %p245 = por %p243, %p244
      %p247 = scmp.ne.s32.totalorder %s232, %s246
      %p248 = scmp.eq.s32.totalorder %s28, 0
      %p249 = por %p247, %p248
      %s250 = ssub.s32 %s22, %s29
      %p251 = scmp.eq.s32.totalorder %s250, 0
      %s253 = sadd.s32 %s252, 1
      %s254 = scalar_select %p251, %s252, %s253
      %p257 = pneg %p251
      %p258 = scmp.eq.s32.totalorder %s22, 1
      %p259 = por %p257, %p258
      %p260 = scmp.ne.s32.totalorder %s252, %s255
      %p261 = scmp.eq.s32.totalorder %s22, 0
      %p262 = por %p260, %p261
      %p263 = scmp.ne.s32.totalorder %s252, %s255
      %p264 = scmp.eq.s32.totalorder %s27, 1
      %p265 = por %p263, %p264
      %p266 = scmp.ne.s32.totalorder %s255, %s256
      %p267 = scmp.eq.s32.totalorder %s27, 0
      %p268 = por %p266, %p267
      %p269 = scmp.ne.s32.totalorder %s255, %s256
      %p270 = scmp.eq.s32.totalorder %s28, 1
      %p271 = por %p269, %p270
      %p273 = scmp.ne.s32.totalorder %s256, %s272
      %p274 = scmp.eq.s32.totalorder %s28, 0
      %p275 = por %p273, %p274
      %p276 = scmp.le.s32.totalorder 1, %s22
      %p277 = scmp.lt.s32.totalorder %s22, 3
      %p278 = pnand %p276, %p277
      %p279 = pneg %p278
      // Predicated region
      $region9: #{tpu_custom_call.1} parent=5 // pred_check
        _
      $region10: #{tpu_custom_call.1} parent=5 // pred_check_branch
        %281 = sbr.rel (%p278) target = $region12
      $region11: #{tpu_custom_call.1} parent=5 // pred_region
        %s282 = ssub.s32 %s22, 1
        // Predicated region
        $region13: #{tpu_custom_call.1} parent=11 // pred_check
          %p283 = pneg %p95
        $region14: #{tpu_custom_call.1} parent=11 // pred_check_branch
          %285 = sbr.rel (%p283) target = $region16
        $region15: #{tpu_custom_call.1} parent=11 // pred_region
          %s287 = ssub.s32 512, 512
          %288 = vsyncadd [#allocation5], %s287
          %s289 = sshll.u32 [#allocation4], 4
          %s290 = int_to_ptr.vmem [resolvable:$true] %s289
          %295 = dma.hbm_to_vmem [thread:$0]  %s2, 512, %s290, [#allocation5], 128, 128, 8
        $region16: #{tpu_custom_call.1} parent=11 // pred_fallthru
          _
        // Predicated region
        $region17: #{tpu_custom_call.1} parent=11 // pred_check
          %p296 = pneg %p116
        $region18: #{tpu_custom_call.1} parent=11 // pred_check_branch
          %298 = sbr.rel (%p296) target = $region20
        $region19: #{tpu_custom_call.1} parent=11 // pred_region
          _
        $region20: #{tpu_custom_call.1} parent=11 // pred_fallthru
          _
        // Predicated region
        $region21: #{tpu_custom_call.1} parent=11 // pred_check
          %p299 = pneg %p137
        $region22: #{tpu_custom_call.1} parent=11 // pred_check_branch
          %301 = sbr.rel (%p299) target = $region24
        $region23: #{tpu_custom_call.1} parent=11 // pred_region
          %s303 = ssub.s32 24576, 24576
          %304 = vsyncadd [#allocation8], %s303
          %s305 = sshll.u32 [#allocation7], 4
          %s306 = int_to_ptr.vmem [resolvable:$true] %s305
          %311 = dma.hbm_to_vmem [thread:$0]  %s4, 24576, %s306, [#allocation8], 128, 128, 8
        $region24: #{tpu_custom_call.1} parent=11 // pred_fallthru
          _
        // Predicated region
        $region25: #{tpu_custom_call.1} parent=11 // pred_check
          %p312 = pneg %p158
        $region26: #{tpu_custom_call.1} parent=11 // pred_check_branch
          %314 = sbr.rel (%p312) target = $region28
        $region27: #{tpu_custom_call.1} parent=11 // pred_region
          _
        $region28: #{tpu_custom_call.1} parent=11 // pred_fallthru
          _
        // Predicated region
        $region29: #{tpu_custom_call.1} parent=11 // pred_check
          %p315 = pneg %p179
        $region30: #{tpu_custom_call.1} parent=11 // pred_check_branch
          %317 = sbr.rel (%p315) target = $region32
        $region31: #{tpu_custom_call.1} parent=11 // pred_region
          %s319 = ssub.s32 8192, 8192
          %320 = vsyncadd [#allocation8], %s319
          %s321 = sshll.u32 [#allocation9], 4
          %s322 = int_to_ptr.vmem [resolvable:$true] %s321
          %327 = dma.hbm_to_vmem [thread:$0]  %s6, 8192, %s322, [#allocation8], 128, 128, 8
        $region32: #{tpu_custom_call.1} parent=11 // pred_fallthru
          _
        // Predicated region
        $region33: #{tpu_custom_call.1} parent=11 // pred_check
          %p328 = pneg %p200
        $region34: #{tpu_custom_call.1} parent=11 // pred_check_branch
          %330 = sbr.rel (%p328) target = $region36
        $region35: #{tpu_custom_call.1} parent=11 // pred_region
          _
        $region36: #{tpu_custom_call.1} parent=11 // pred_fallthru
          _
        // Predicated region
        $region37: #{tpu_custom_call.1} parent=11 // pred_check
          %p331 = pneg %p221
        $region38: #{tpu_custom_call.1} parent=11 // pred_check_branch
          %333 = sbr.rel (%p331) target = $region40
        $region39: #{tpu_custom_call.1} parent=11 // pred_region
          %s335 = ssub.s32 2048, 2048
          %336 = vsyncadd [#allocation11], %s335
          %s337 = sshll.u32 [#allocation10], 4
          %s338 = int_to_ptr.vmem [resolvable:$true] %s337
          %343 = dma.hbm_to_vmem [thread:$0]  %s8, 2048, %s338, [#allocation11], 128, 128, 8
        $region40: #{tpu_custom_call.1} parent=11 // pred_fallthru
          _
        // Predicated region
        $region41: #{tpu_custom_call.1} parent=11 // pred_check
          %p344 = pneg %p242
        $region42: #{tpu_custom_call.1} parent=11 // pred_check_branch
          %346 = sbr.rel (%p344) target = $region44
        $region43: #{tpu_custom_call.1} parent=11 // pred_region
          _
        $region44: #{tpu_custom_call.1} parent=11 // pred_fallthru
          _
      $region12: #{tpu_custom_call.1} parent=5 // pred_fallthru
        _
      %p347 = scmp.lt.s32.totalorder %s22, 2
      // Predicated region
      $region45: #{tpu_custom_call.1} parent=5 // pred_check
        %p348 = pneg %p347
      $region46: #{tpu_custom_call.1} parent=5 // pred_check_branch
        %350 = sbr.rel (%p348) target = $region48
      $region47: #{tpu_custom_call.1} parent=5 // pred_region
        // Predicated region
        $region49: #{tpu_custom_call.1} parent=47 // pred_check
          %p351 = pneg %p42
        $region50: #{tpu_custom_call.1} parent=47 // pred_check_branch
          %353 = sbr.rel (%p351) target = $region52
        $region51: #{tpu_custom_call.1} parent=47 // pred_region
          %p354 = scmp.lt.s32.totalorder %s22, 1
          %s355 = scalar_select %p354, %s22, 1
          %s356 = smul.addr %s355, 2
          %s357 = smul.addr %s356, 8
          %s358 = scalar_lea.vmem %s0, %s357
        $region52: #{tpu_custom_call.1} parent=47 // pred_fallthru
          _
        // Predicated region
        $region53: #{tpu_custom_call.1} parent=47 // pred_check
          %p359 = pneg %p68
        $region54: #{tpu_custom_call.1} parent=47 // pred_check_branch
          %361 = sbr.rel (%p359) target = $region56
        $region55: #{tpu_custom_call.1} parent=47 // pred_region
          %p362 = scmp.lt.s32.totalorder %s22, 1
          %s363 = scalar_select %p362, %s22, 1
          %s364 = smul.addr %s363, 2
          %s365 = smul.addr %s364, 8
          %s366 = scalar_lea.vmem %s1, %s365
        $region56: #{tpu_custom_call.1} parent=47 // pred_fallthru
          _
      $region48: #{tpu_custom_call.1} parent=5 // pred_fallthru
        _
      %p367 = scmp.le.s32.totalorder 1, %s22
      %p368 = scmp.lt.s32.totalorder %s22, 3
      %p369 = pnand %p367, %p368
      %p370 = pneg %p369
      // Predicated region
      $region57: #{tpu_custom_call.1} parent=5 // pred_check
        _
      $region58: #{tpu_custom_call.1} parent=5 // pred_check_branch
        %372 = sbr.rel (%p369) target = $region60
      $region59: #{tpu_custom_call.1} parent=5 // pred_region
        %s373 = ssub.s32 %s22, 1
        // Predicated region
        $region61: #{tpu_custom_call.1} parent=59 // pred_check
          %p374 = pneg %p95
        $region62: #{tpu_custom_call.1} parent=59 // pred_check_branch
          %376 = sbr.rel (%p374) target = $region64
        $region63: #{tpu_custom_call.1} parent=59 // pred_region
          %377 = dma.done [#allocation5], 512
        $region64: #{tpu_custom_call.1} parent=59 // pred_fallthru
          _
        // Predicated region
        $region65: #{tpu_custom_call.1} parent=59 // pred_check
          %p378 = pneg %p137
        $region66: #{tpu_custom_call.1} parent=59 // pred_check_branch
          %380 = sbr.rel (%p378) target = $region68
        $region67: #{tpu_custom_call.1} parent=59 // pred_region
          %381 = dma.done [#allocation8], 24576
        $region68: #{tpu_custom_call.1} parent=59 // pred_fallthru
          _
        // Predicated region
        $region69: #{tpu_custom_call.1} parent=59 // pred_check
          %p382 = pneg %p179
        $region70: #{tpu_custom_call.1} parent=59 // pred_check_branch
          %384 = sbr.rel (%p382) target = $region72
        $region71: #{tpu_custom_call.1} parent=59 // pred_region
          %385 = dma.done [#allocation8], 8192
        $region72: #{tpu_custom_call.1} parent=59 // pred_fallthru
          _
        // Predicated region
        $region73: #{tpu_custom_call.1} parent=59 // pred_check
          %p386 = pneg %p221
        $region74: #{tpu_custom_call.1} parent=59 // pred_check_branch
          %388 = sbr.rel (%p386) target = $region76
        $region75: #{tpu_custom_call.1} parent=59 // pred_region
          %389 = dma.done [#allocation11], 2048
        $region76: #{tpu_custom_call.1} parent=59 // pred_fallthru
          _
        %p390 = scmp.lt.s32.totalorder %s27, 1
        %s391 = scalar_select %p390, %s27, 1
        %s392 = smul.addr %s391, 2
        %s393 = smul.addr %s392, 8
        %s394 = scalar_lea.vmem %s0, %s393
        %p395 = pneg %p48
        %p396 = pneg %p45
        %p397 = scmp.lt.s32.totalorder %s27, 1
        %s398 = scalar_select %p397, %s27, 1
        %s399 = smul.addr %s398, 2
        %s400 = smul.addr %s399, 8
        %s401 = scalar_lea.vmem %s1, %s400
        %p402 = pneg %p74
        %p403 = pneg %p71
        %p404 = pneg %p95
        %p405 = pneg %p92
        %p406 = pneg %p116
        %p407 = pneg %p113
        %p408 = pneg %p137
        %p409 = pneg %p134
        %p410 = pneg %p158
        %p411 = pneg %p155
        %p412 = pneg %p179
        %p413 = pneg %p176
        %p414 = pneg %p200
        %p415 = pneg %p197
        %p416 = pneg %p221
        %p417 = pneg %p218
        %p418 = pneg %p242
        %p419 = pneg %p239
        %p420 = pneg %p268
        %p421 = pneg %p265
        %s422 = sand.u32 %s255, 1
        %s423 = scalar_lea.sflag [#allocation6], %s422
        %s424 = sand.u32 %s255, 1
        %s425 = smul.addr %s424, 16
        %s426 = scalar_lea.vmem [#allocation12], %s425
        %p427 = scmp.lt.s32.totalorder %s27, 1
        %s428 = scalar_select %p427, %s27, 1
        %s429 = smul.addr %s428, 2
        %s430 = smul.addr %s429, 8
        %s431 = scalar_lea.vmem %s0, %s430
        %p432 = scmp.lt.s32.totalorder %s27, 1
        %s433 = scalar_select %p432, %s27, 1
        %s434 = smul.addr %s433, 2
        %s435 = smul.addr %s434, 8
        %s436 = scalar_lea.vmem %s1, %s435
        %v437 = vld [vmem:[%s431] sm:$0xff]
        %v438 = vld [vmem:[%s431 + $0x8] sm:$0xff]
        %v439 = vld [vmem:[%s436] sm:$0xff]
        %v440 = vld [vmem:[%s436 + $0x8] sm:$0xff]
        %442 = vset.pattern.permute.xlu0 0
        %443 = vperm.xlu0 %442, %v439
        %v444 = vpop.permute.xlu0 %443
        %447 = vset.pattern.permute.xlu0 0
        %448 = vperm.xlu0 %447, %v440
        %v449 = vpop.permute.xlu0 %448
        %451 = vst [vmem:[#allocation2] sm:$0xff] 0.0
        %452 = vst [vmem:[#allocation2 + $0x8] sm:$0xff] 0.0
        %453 = vst [vmem:[#allocation2 + $0x10] sm:$0xff] 0.0
        %454 = vst [vmem:[#allocation2 + $0x18] sm:$0xff] 0.0
        %v455 = vld [vmem:[#allocation4] sm:$0xff]
        %v456 = vld [vmem:[#allocation4 + $0x8] sm:$0xff]
        %v457 = vld [vmem:[#allocation4 + $0x10] sm:$0xff]
        %v458 = vld [vmem:[#allocation4 + $0x18] sm:$0xff]
        %v459 = vld [vmem:[%s3] sm:$0x1]
        %v461 = vlaneseq
        %v462 = vshrl.u32 %v461, 7
        %v463 = vsub.s32 0, %v462
        %v464 = vrot.slane %v459, %v463
        %vm466 = vcmask 261120
        %v468 = vsel %vm466, %v437, 0
        %v471 = vsel %vm466, %v438, 0
        %473 = vmatprep.subr.mxu0 0.0
        %474 = vmatpush1.msra.mxu0 0.0
        %475 = vmatprep.subr.mxu0 0.0
        %476 = vmatpush1.msra.mxu0 0.0
        %477 = vmatprep.subr.mxu0 0.0
        %478 = vmatpush1.msra.mxu0 0.0
        %479 = vmatprep.subr.mxu0 0.0
        %480 = vmatpush1.msra.mxu0 0.0
        %481 = vmatprep.subr.mxu0 0.0
        %482 = vmatpush1.msra.mxu0 0.0
        %483 = vmatprep.subr.mxu0 0.0
        %484 = vmatpush1.msra.mxu0 0.0
        %485 = vmatprep.subr.mxu0 0.0
        %486 = vmatpush1.msra.mxu0 0.0
        %487 = vmatprep.subr.mxu0 0.0
        %488 = vmatpush1.msra.mxu0 0.0
        %489 = vmatprep.subr.mxu0 0.0
        %490 = vmatpush1.msra.mxu0 0.0
        %491 = vmatprep.subr.mxu0 0.0
        %492 = vmatpush1.msra.mxu0 0.0
        %493 = vmatprep.subr.mxu0 0.0
        %494 = vmatpush1.msra.mxu0 0.0
        %495 = vmatprep.subr.mxu0 0.0
        %496 = vmatpush1.msra.mxu0 0.0
        %497 = vmatprep.subr.mxu0 0.0
        %498 = vmatpush1.msra.mxu0 %v458
        %499 = vmatprep.subr.mxu0 0.0
        %500 = vmatpush1.msra.mxu0 %v457
        %501 = vmatprep.subr.mxu0 0.0
        %502 = vmatpush1.msra.mxu0 %v456
        %503 = vmatprep.subr.mxu0 0.0
        %504 = vmatpush1.msra.mxu0 %v455
        %505 = vmatprep.subr.mxu0 0.0
        %506 = vmatpush2.msra.mxu0 0.0
        %507 = vmatprep.subr.mxu0 0.0
        %508 = vmatpush2.msra.mxu0 0.0
        %509 = vmatprep.subr.mxu0 0.0
        %510 = vmatpush2.msra.mxu0 0.0
        %511 = vmatprep.subr.mxu0 0.0
        %512 = vmatpush2.msra.mxu0 0.0
        %513 = vmatprep.subr.mxu0 0.0
        %514 = vmatpush2.msra.mxu0 0.0
        %515 = vmatprep.subr.mxu0 0.0
        %516 = vmatpush2.msra.mxu0 0.0
        %517 = vmatprep.subr.mxu0 0.0
        %518 = vmatpush2.msra.mxu0 0.0
        %519 = vmatprep.subr.mxu0 0.0
        %520 = vmatpush2.msra.mxu0 0.0
        %521 = vmatprep.subr.mxu0 0.0
        %522 = vmatpush2.msra.mxu0 0.0
        %523 = vmatprep.subr.mxu0 0.0
        %524 = vmatpush2.msra.mxu0 0.0
        %525 = vmatprep.subr.mxu0 0.0
        %526 = vmatpush2.msra.mxu0 0.0
        %527 = vmatprep.subr.mxu0 0.0
        %528 = vmatpush2.msra.mxu0 0.0
        %529 = vmatprep.subr.mxu0 0.0
        %530 = vmatpush2.msra.mxu0 0.0
        %531 = vmatprep.subr.mxu0 0.0
        %532 = vmatpush2.msra.mxu0 0.0
        %533 = vmatprep.subr.mxu0 0.0
        %534 = vmatpush2.msra.mxu0 0.0
        %535 = vmatprep.subr.mxu0 0.0
        %536 = vmatpush2.msra.mxu0 0.0
        %537 = vmatprep.mubr.f32.mxu0 0.0
        %538 = vmatmul.mubr.f32.gmra.mxu0 %v468
        %v539 = vpop.f32.mrf.mxu0
        %v540 = vadd.f32 %v464, %v539
        %v541 = vpop.f32.mrf.mxu0
        %542 = vmatprep.mubr.f32.mxu0 0.0
        %543 = vmatmul.mubr.f32.gmra.mxu0 %v471
        %v544 = vpop.f32.mrf.mxu0
        %v545 = vadd.f32 %v464, %v544
        %v546 = vpop.f32.mrf.mxu0
        %547 = vdwg.mxu0
        loop: start=0, step=1, limit=4
        $region77: #{tpu_custom_call.1} parent=59 // loop_pre_header
          _
        $region78: #{tpu_custom_call.1} parent=59 // loop_header
          %s549 = sphi 0, %s553
          %p550 = scmp.ge.s32.totalorder %s549, 4
          %v554 = vphi %v540, %v891
          %v555 = vphi %v545, %v892
        $region79: #{tpu_custom_call.1} parent=59 // loop_header_branch
          %552 = sbr.rel (%p550) target = $region83
        $region80: #{tpu_custom_call.1} parent=59 // loop_body
          %556 = vst [vmem:[#allocation2 + $0x8] sm:$0xff] %v554
          %557 = vst [vmem:[#allocation2 + $0x10] sm:$0xff] %v555
          %s558 = ssub.s32 7, %s549
          %s559 = scalar_lea.vmem [#allocation2], %s558
          %v560 = vld [vmem:[%s559] sm:$0xff]
          %v561 = vld [vmem:[%s559 + $0x8] sm:$0xff]
          %s562 = sadd.s32 %s549, 9
          %s563 = scalar_lea.vmem [#allocation2], %s562
          %v564 = vld [vmem:[%s563] sm:$0xff]
          %v565 = vld [vmem:[%s563 + $0x8] sm:$0xff]
          %566 = vst [vmem:[#allocation3] sm:$0xff] %v560
          %567 = vst [vmem:[#allocation3 + $0x18] sm:$0xff] %v561
          %568 = vst [vmem:[#allocation3 + $0x8] sm:$0xff] %v554
          %569 = vst [vmem:[#allocation3 + $0x20] sm:$0xff] %v555
          %570 = vst [vmem:[#allocation3 + $0x10] sm:$0xff] %v564
          %571 = vst [vmem:[#allocation3 + $0x28] sm:$0xff] %v565
          %v572 = vld [vmem:[#allocation3] sm:$0xff]
          %v573 = vld [vmem:[#allocation3 + $0x8] sm:$0xff]
          %v574 = vld [vmem:[#allocation3 + $0x10] sm:$0xff]
          %v575 = vld [vmem:[#allocation3 + $0x18] sm:$0xff]
          %v576 = vld [vmem:[#allocation3 + $0x20] sm:$0xff]
          %v577 = vld [vmem:[#allocation3 + $0x28] sm:$0xff]
          %s578 = smul.u32 %s549, 384
          %s579 = scalar_lea.vmem [#allocation7], %s578
          %v580 = vld [vmem:[%s579] sm:$0xff]
          %v581 = vld [vmem:[%s579 + $0x8] sm:$0xff]
          %v582 = vld [vmem:[%s579 + $0x10] sm:$0xff]
          %v583 = vld [vmem:[%s579 + $0x18] sm:$0xff]
          %v584 = vld [vmem:[%s579 + $0x20] sm:$0xff]
          %v585 = vld [vmem:[%s579 + $0x28] sm:$0xff]
          %v586 = vld [vmem:[%s579 + $0x30] sm:$0xff]
          %v587 = vld [vmem:[%s579 + $0x38] sm:$0xff]
          %v588 = vld [vmem:[%s579 + $0x40] sm:$0xff]
          %v589 = vld [vmem:[%s579 + $0x48] sm:$0xff]
          %v590 = vld [vmem:[%s579 + $0x50] sm:$0xff]
          %v591 = vld [vmem:[%s579 + $0x58] sm:$0xff]
          %v592 = vld [vmem:[%s579 + $0x60] sm:$0xff]
          %v593 = vld [vmem:[%s579 + $0x68] sm:$0xff]
          %v594 = vld [vmem:[%s579 + $0x70] sm:$0xff]
          %v595 = vld [vmem:[%s579 + $0x78] sm:$0xff]
          %v596 = vld [vmem:[%s579 + $0x80] sm:$0xff]
          %v597 = vld [vmem:[%s579 + $0x88] sm:$0xff]
          %v598 = vld [vmem:[%s579 + $0x90] sm:$0xff]
          %v599 = vld [vmem:[%s579 + $0x98] sm:$0xff]
          %v600 = vld [vmem:[%s579 + $0xa0] sm:$0xff]
          %v601 = vld [vmem:[%s579 + $0xa8] sm:$0xff]
          %v602 = vld [vmem:[%s579 + $0xb0] sm:$0xff]
          %v603 = vld [vmem:[%s579 + $0xb8] sm:$0xff]
          %v604 = vld [vmem:[%s579 + $0xc0] sm:$0xff]
          %v605 = vld [vmem:[%s579 + $0xc8] sm:$0xff]
          %v606 = vld [vmem:[%s579 + $0xd0] sm:$0xff]
          %v607 = vld [vmem:[%s579 + $0xd8] sm:$0xff]
          %v608 = vld [vmem:[%s579 + $0xe0] sm:$0xff]
          %v609 = vld [vmem:[%s579 + $0xe8] sm:$0xff]
          %v610 = vld [vmem:[%s579 + $0xf0] sm:$0xff]
          %v611 = vld [vmem:[%s579 + $0xf8] sm:$0xff]
          %v612 = vld [vmem:[%s579 + $0x100] sm:$0xff]
          %v613 = vld [vmem:[%s579 + $0x108] sm:$0xff]
          %v614 = vld [vmem:[%s579 + $0x110] sm:$0xff]
          %v615 = vld [vmem:[%s579 + $0x118] sm:$0xff]
          %v616 = vld [vmem:[%s579 + $0x120] sm:$0xff]
          %v617 = vld [vmem:[%s579 + $0x128] sm:$0xff]
          %v618 = vld [vmem:[%s579 + $0x130] sm:$0xff]
          %v619 = vld [vmem:[%s579 + $0x138] sm:$0xff]
          %v620 = vld [vmem:[%s579 + $0x140] sm:$0xff]
          %v621 = vld [vmem:[%s579 + $0x148] sm:$0xff]
          %v622 = vld [vmem:[%s579 + $0x150] sm:$0xff]
          %v623 = vld [vmem:[%s579 + $0x158] sm:$0xff]
          %v624 = vld [vmem:[%s579 + $0x160] sm:$0xff]
          %v625 = vld [vmem:[%s579 + $0x168] sm:$0xff]
          %v626 = vld [vmem:[%s579 + $0x170] sm:$0xff]
          %v627 = vld [vmem:[%s579 + $0x178] sm:$0xff]
          %s628 = scalar_lea.vmem %s5, %s549
          %v629 = vld [vmem:[%s628] sm:$0x1]
          %v631 = vlaneseq
          %v632 = vshrl.u32 %v631, 7
          %v633 = vsub.s32 0, %v632
          %v634 = vrot.slane %v629, %v633
          %636 = vmatprep.subr.mxu0 0.0
          %637 = vmatpush1.msra.mxu0 %v595
          %638 = vmatprep.subr.mxu0 0.0
          %639 = vmatpush1.msra.mxu0 %v594
          %640 = vmatprep.subr.mxu0 0.0
          %641 = vmatpush1.msra.mxu0 %v593
          %642 = vmatprep.subr.mxu0 0.0
          %643 = vmatpush1.msra.mxu0 %v592
          %644 = vmatprep.subr.mxu0 0.0
          %645 = vmatpush1.msra.mxu0 %v591
          %646 = vmatprep.subr.mxu0 0.0
          %647 = vmatpush1.msra.mxu0 %v590
          %648 = vmatprep.subr.mxu0 0.0
          %649 = vmatpush1.msra.mxu0 %v589
          %650 = vmatprep.subr.mxu0 0.0
          %651 = vmatpush1.msra.mxu0 %v588
          %652 = vmatprep.subr.mxu0 0.0
          %653 = vmatpush1.msra.mxu0 %v587
          %654 = vmatprep.subr.mxu0 0.0
          %655 = vmatpush1.msra.mxu0 %v586
          %656 = vmatprep.subr.mxu0 0.0
          %657 = vmatpush1.msra.mxu0 %v585
          %658 = vmatprep.subr.mxu0 0.0
          %659 = vmatpush1.msra.mxu0 %v584
          %660 = vmatprep.subr.mxu0 0.0
          %661 = vmatpush1.msra.mxu0 %v583
          %662 = vmatprep.subr.mxu0 0.0
          %663 = vmatpush1.msra.mxu0 %v582
          %664 = vmatprep.subr.mxu0 0.0
          %665 = vmatpush1.msra.mxu0 %v581
          %666 = vmatprep.subr.mxu0 0.0
          %667 = vmatpush1.msra.mxu0 %v580
          %668 = vmatprep.subr.mxu0 0.0
          %669 = vmatpush2.msra.mxu0 %v611
          %670 = vmatprep.subr.mxu0 0.0
          %671 = vmatpush2.msra.mxu0 %v610
          %672 = vmatprep.subr.mxu0 0.0
          %673 = vmatpush2.msra.mxu0 %v609
          %674 = vmatprep.subr.mxu0 0.0
          %675 = vmatpush2.msra.mxu0 %v608
          %676 = vmatprep.subr.mxu0 0.0
          %677 = vmatpush2.msra.mxu0 %v607
          %678 = vmatprep.subr.mxu0 0.0
          %679 = vmatpush2.msra.mxu0 %v606
          %680 = vmatprep.subr.mxu0 0.0
          %681 = vmatpush2.msra.mxu0 %v605
          %682 = vmatprep.subr.mxu0 0.0
          %683 = vmatpush2.msra.mxu0 %v604
          %684 = vmatprep.subr.mxu0 0.0
          %685 = vmatpush2.msra.mxu0 %v603
          %686 = vmatprep.subr.mxu0 0.0
          %687 = vmatpush2.msra.mxu0 %v602
          %688 = vmatprep.subr.mxu0 0.0
          %689 = vmatpush2.msra.mxu0 %v601
          %690 = vmatprep.subr.mxu0 0.0
          %691 = vmatpush2.msra.mxu0 %v600
          %692 = vmatprep.subr.mxu0 0.0
          %693 = vmatpush2.msra.mxu0 %v599
          %694 = vmatprep.subr.mxu0 0.0
          %695 = vmatpush2.msra.mxu0 %v598
          %696 = vmatprep.subr.mxu0 0.0
          %697 = vmatpush2.msra.mxu0 %v597
          %698 = vmatprep.subr.mxu0 0.0
          %699 = vmatpush2.msra.mxu0 %v596
          %700 = vmatprep.mubr.f32.mxu0 %v573
          %701 = vmatmul.mubr.f32.gmra.mxu0 %v572
          %v702 = vpop.f32.mrf.mxu0
          %v703 = vadd.f32 %v634, %v702
          %v704 = vpop.f32.mrf.mxu0
          %705 = vmatprep.mubr.f32.mxu0 %v576
          %706 = vmatmul.mubr.f32.gmra.mxu0 %v575
          %v707 = vpop.f32.mrf.mxu0
          %v708 = vadd.f32 %v634, %v707
          %v709 = vpop.f32.mrf.mxu0
          %710 = vdwg.mxu0
          %711 = vmatprep.subr.mxu0 0.0
          %712 = vmatpush1.msra.mxu0 %v627
          %713 = vmatprep.subr.mxu0 0.0
          %714 = vmatpush1.msra.mxu0 %v626
          %715 = vmatprep.subr.mxu0 0.0
          %716 = vmatpush1.msra.mxu0 %v625
          %717 = vmatprep.subr.mxu0 0.0
          %718 = vmatpush1.msra.mxu0 %v624
          %719 = vmatprep.subr.mxu0 0.0
          %720 = vmatpush1.msra.mxu0 %v623
          %721 = vmatprep.subr.mxu0 0.0
          %722 = vmatpush1.msra.mxu0 %v622
          %723 = vmatprep.subr.mxu0 0.0
          %724 = vmatpush1.msra.mxu0 %v621
          %725 = vmatprep.subr.mxu0 0.0
          %726 = vmatpush1.msra.mxu0 %v620
          %727 = vmatprep.subr.mxu0 0.0
          %728 = vmatpush1.msra.mxu0 %v619
          %729 = vmatprep.subr.mxu0 0.0
          %730 = vmatpush1.msra.mxu0 %v618
          %731 = vmatprep.subr.mxu0 0.0
          %732 = vmatpush1.msra.mxu0 %v617
          %733 = vmatprep.subr.mxu0 0.0
          %734 = vmatpush1.msra.mxu0 %v616
          %735 = vmatprep.subr.mxu0 0.0
          %736 = vmatpush1.msra.mxu0 %v615
          %737 = vmatprep.subr.mxu0 0.0
          %738 = vmatpush1.msra.mxu0 %v614
          %739 = vmatprep.subr.mxu0 0.0
          %740 = vmatpush1.msra.mxu0 %v613
          %741 = vmatprep.subr.mxu0 0.0
          %742 = vmatpush1.msra.mxu0 %v612
          %743 = vmatprep.subr.mxu0 0.0
          %744 = vmatpush2.msra.mxu0 0.0
          %745 = vmatprep.subr.mxu0 0.0
          %746 = vmatpush2.msra.mxu0 0.0
          %747 = vmatprep.subr.mxu0 0.0
          %748 = vmatpush2.msra.mxu0 0.0
          %749 = vmatprep.subr.mxu0 0.0
          %750 = vmatpush2.msra.mxu0 0.0
          %751 = vmatprep.subr.mxu0 0.0
          %752 = vmatpush2.msra.mxu0 0.0
          %753 = vmatprep.subr.mxu0 0.0
          %754 = vmatpush2.msra.mxu0 0.0
          %755 = vmatprep.subr.mxu0 0.0
          %756 = vmatpush2.msra.mxu0 0.0
          %757 = vmatprep.subr.mxu0 0.0
          %758 = vmatpush2.msra.mxu0 0.0
          %759 = vmatprep.subr.mxu0 0.0
          %760 = vmatpush2.msra.mxu0 0.0
          %761 = vmatprep.subr.mxu0 0.0
          %762 = vmatpush2.msra.mxu0 0.0
          %763 = vmatprep.subr.mxu0 0.0
          %764 = vmatpush2.msra.mxu0 0.0
          %765 = vmatprep.subr.mxu0 0.0
          %766 = vmatpush2.msra.mxu0 0.0
          %767 = vmatprep.subr.mxu0 0.0
          %768 = vmatpush2.msra.mxu0 0.0
          %769 = vmatprep.subr.mxu0 0.0
          %770 = vmatpush2.msra.mxu0 0.0
          %771 = vmatprep.subr.mxu0 0.0
          %772 = vmatpush2.msra.mxu0 0.0
          %773 = vmatprep.subr.mxu0 0.0
          %774 = vmatpush2.msra.mxu0 0.0
          %775 = vmatprep.mubr.f32.mxu0 0.0
          %776 = vmatmul.mubr.f32.gmra.mxu0 %v574
          %v777 = vpop.f32.mrf.mxu0
          %v778 = vadd.f32 %v703, %v777
          %v779 = vpop.f32.mrf.mxu0
          %780 = vmatprep.mubr.f32.mxu0 0.0
          %781 = vmatmul.mubr.f32.gmra.mxu0 %v577
          %v782 = vpop.f32.mrf.mxu0
          %v783 = vadd.f32 %v708, %v782
          %v784 = vpop.f32.mrf.mxu0
          %785 = vdwg.mxu0
          %v786 = vmax.f32 %v778, 0.0
          %v787 = vmax.f32 %v783, 0.0
          %s788 = smul.u32 %s549, 128
          %s789 = scalar_lea.vmem [#allocation9], %s788
          %v790 = vld [vmem:[%s789] sm:$0xff]
          %v791 = vld [vmem:[%s789 + $0x8] sm:$0xff]
          %v792 = vld [vmem:[%s789 + $0x10] sm:$0xff]
          %v793 = vld [vmem:[%s789 + $0x18] sm:$0xff]
          %v794 = vld [vmem:[%s789 + $0x20] sm:$0xff]
          %v795 = vld [vmem:[%s789 + $0x28] sm:$0xff]
          %v796 = vld [vmem:[%s789 + $0x30] sm:$0xff]
          %v797 = vld [vmem:[%s789 + $0x38] sm:$0xff]
          %v798 = vld [vmem:[%s789 + $0x40] sm:$0xff]
          %v799 = vld [vmem:[%s789 + $0x48] sm:$0xff]
          %v800 = vld [vmem:[%s789 + $0x50] sm:$0xff]
          %v801 = vld [vmem:[%s789 + $0x58] sm:$0xff]
          %v802 = vld [vmem:[%s789 + $0x60] sm:$0xff]
          %v803 = vld [vmem:[%s789 + $0x68] sm:$0xff]
          %v804 = vld [vmem:[%s789 + $0x70] sm:$0xff]
          %v805 = vld [vmem:[%s789 + $0x78] sm:$0xff]
          %s806 = scalar_lea.vmem %s7, %s549
          %v807 = vld [vmem:[%s806] sm:$0x1]
          %v809 = vlaneseq
          %v810 = vshrl.u32 %v809, 7
          %v811 = vsub.s32 0, %v810
          %v812 = vrot.slane %v807, %v811
          %814 = vmatprep.subr.mxu0 0.0
          %815 = vmatpush1.msra.mxu0 %v805
          %816 = vmatprep.subr.mxu0 0.0
          %817 = vmatpush1.msra.mxu0 %v804
          %818 = vmatprep.subr.mxu0 0.0
          %819 = vmatpush1.msra.mxu0 %v803
          %820 = vmatprep.subr.mxu0 0.0
          %821 = vmatpush1.msra.mxu0 %v802
          %822 = vmatprep.subr.mxu0 0.0
          %823 = vmatpush1.msra.mxu0 %v801
          %824 = vmatprep.subr.mxu0 0.0
          %825 = vmatpush1.msra.mxu0 %v800
          %826 = vmatprep.subr.mxu0 0.0
          %827 = vmatpush1.msra.mxu0 %v799
          %828 = vmatprep.subr.mxu0 0.0
          %829 = vmatpush1.msra.mxu0 %v798
          %830 = vmatprep.subr.mxu0 0.0
          %831 = vmatpush1.msra.mxu0 %v797
          %832 = vmatprep.subr.mxu0 0.0
          %833 = vmatpush1.msra.mxu0 %v796
          %834 = vmatprep.subr.mxu0 0.0
          %835 = vmatpush1.msra.mxu0 %v795
          %836 = vmatprep.subr.mxu0 0.0
          %837 = vmatpush1.msra.mxu0 %v794
          %838 = vmatprep.subr.mxu0 0.0
          %839 = vmatpush1.msra.mxu0 %v793
          %840 = vmatprep.subr.mxu0 0.0
          %841 = vmatpush1.msra.mxu0 %v792
          %842 = vmatprep.subr.mxu0 0.0
          %843 = vmatpush1.msra.mxu0 %v791
          %844 = vmatprep.subr.mxu0 0.0
          %845 = vmatpush1.msra.mxu0 %v790
          %846 = vmatprep.subr.mxu0 0.0
          %847 = vmatpush2.msra.mxu0 0.0
          %848 = vmatprep.subr.mxu0 0.0
          %849 = vmatpush2.msra.mxu0 0.0
          %850 = vmatprep.subr.mxu0 0.0
          %851 = vmatpush2.msra.mxu0 0.0
          %852 = vmatprep.subr.mxu0 0.0
          %853 = vmatpush2.msra.mxu0 0.0
          %854 = vmatprep.subr.mxu0 0.0
          %855 = vmatpush2.msra.mxu0 0.0
          %856 = vmatprep.subr.mxu0 0.0
          %857 = vmatpush2.msra.mxu0 0.0
          %858 = vmatprep.subr.mxu0 0.0
          %859 = vmatpush2.msra.mxu0 0.0
          %860 = vmatprep.subr.mxu0 0.0
          %861 = vmatpush2.msra.mxu0 0.0
          %862 = vmatprep.subr.mxu0 0.0
          %863 = vmatpush2.msra.mxu0 0.0
          %864 = vmatprep.subr.mxu0 0.0
          %865 = vmatpush2.msra.mxu0 0.0
          %866 = vmatprep.subr.mxu0 0.0
          %867 = vmatpush2.msra.mxu0 0.0
          %868 = vmatprep.subr.mxu0 0.0
          %869 = vmatpush2.msra.mxu0 0.0
          %870 = vmatprep.subr.mxu0 0.0
          %871 = vmatpush2.msra.mxu0 0.0
          %872 = vmatprep.subr.mxu0 0.0
          %873 = vmatpush2.msra.mxu0 0.0
          %874 = vmatprep.subr.mxu0 0.0
          %875 = vmatpush2.msra.mxu0 0.0
          %876 = vmatprep.subr.mxu0 0.0
          %877 = vmatpush2.msra.mxu0 0.0
          %878 = vmatprep.mubr.f32.mxu0 0.0
          %879 = vmatmul.mubr.f32.gmra.mxu0 %v786
          %v880 = vpop.f32.mrf.mxu0
          %v881 = vadd.f32 %v812, %v880
          %v882 = vpop.f32.mrf.mxu0
          %883 = vmatprep.mubr.f32.mxu0 0.0
          %884 = vmatmul.mubr.f32.gmra.mxu0 %v787
          %v885 = vpop.f32.mrf.mxu0
          %v886 = vadd.f32 %v812, %v885
          %v887 = vpop.f32.mrf.mxu0
          %888 = vdwg.mxu0
          %v889 = vadd.f32 %v881, %v554
          %v890 = vadd.f32 %v886, %v555
          %v891 = vmul.f32 %v889, %v444
          %v892 = vmul.f32 %v890, %v449
        $region81: #{tpu_custom_call.1} parent=59 // loop_footer
          %s553 = sadd.s32 1, %s549
        $region82: #{tpu_custom_call.1} parent=59 // loop_footer_branch
          %548 = sbr.rel target = $region78
        $region83: #{tpu_custom_call.1} parent=59 // loop_exit
          _
        %v893 = vld [vmem:[#allocation10] sm:$0xff]
        %v894 = vld [vmem:[#allocation10 + $0x8] sm:$0xff]
        %v895 = vld [vmem:[#allocation10 + $0x10] sm:$0xff]
        %v896 = vld [vmem:[#allocation10 + $0x18] sm:$0xff]
        %v897 = vld [vmem:[#allocation10 + $0x20] sm:$0xff]
        %v898 = vld [vmem:[#allocation10 + $0x28] sm:$0xff]
        %v899 = vld [vmem:[#allocation10 + $0x30] sm:$0xff]
        %v900 = vld [vmem:[#allocation10 + $0x38] sm:$0xff]
        %v901 = vld [vmem:[#allocation10 + $0x40] sm:$0xff]
        %v902 = vld [vmem:[#allocation10 + $0x48] sm:$0xff]
        %v903 = vld [vmem:[#allocation10 + $0x50] sm:$0xff]
        %v904 = vld [vmem:[#allocation10 + $0x58] sm:$0xff]
        %v905 = vld [vmem:[#allocation10 + $0x60] sm:$0xff]
        %v906 = vld [vmem:[#allocation10 + $0x68] sm:$0xff]
        %v907 = vld [vmem:[#allocation10 + $0x70] sm:$0xff]
        %v908 = vld [vmem:[#allocation10 + $0x78] sm:$0xff]
        %v909 = vld [vmem:[%s9] sm:$0x1]
        %v911 = vlaneseq
        %v912 = vshrl.u32 %v911, 7
        %v913 = vsub.s32 0, %v912
        %v914 = vrot.slane %v909, %v913
        %916 = vmatprep.subr.mxu0 0.0
        %917 = vmatpush1.msra.mxu0 %v908
        %918 = vmatprep.subr.mxu0 0.0
        %919 = vmatpush1.msra.mxu0 %v907
        %920 = vmatprep.subr.mxu0 0.0
        %921 = vmatpush1.msra.mxu0 %v906
        %922 = vmatprep.subr.mxu0 0.0
        %923 = vmatpush1.msra.mxu0 %v905
        %924 = vmatprep.subr.mxu0 0.0
        %925 = vmatpush1.msra.mxu0 %v904
        %926 = vmatprep.subr.mxu0 0.0
        %927 = vmatpush1.msra.mxu0 %v903
        %928 = vmatprep.subr.mxu0 0.0
        %929 = vmatpush1.msra.mxu0 %v902
        %930 = vmatprep.subr.mxu0 0.0
        %931 = vmatpush1.msra.mxu0 %v901
        %932 = vmatprep.subr.mxu0 0.0
        %933 = vmatpush1.msra.mxu0 %v900
        %934 = vmatprep.subr.mxu0 0.0
        %935 = vmatpush1.msra.mxu0 %v899
        %936 = vmatprep.subr.mxu0 0.0
        %937 = vmatpush1.msra.mxu0 %v898
        %938 = vmatprep.subr.mxu0 0.0
        %939 = vmatpush1.msra.mxu0 %v897
        %940 = vmatprep.subr.mxu0 0.0
        %941 = vmatpush1.msra.mxu0 %v896
        %942 = vmatprep.subr.mxu0 0.0
        %943 = vmatpush1.msra.mxu0 %v895
        %944 = vmatprep.subr.mxu0 0.0
        %945 = vmatpush1.msra.mxu0 %v894
        %946 = vmatprep.subr.mxu0 0.0
        %947 = vmatpush1.msra.mxu0 %v893
        %948 = vmatprep.subr.mxu0 0.0
        %949 = vmatpush2.msra.mxu0 0.0
        %950 = vmatprep.subr.mxu0 0.0
        %951 = vmatpush2.msra.mxu0 0.0
        %952 = vmatprep.subr.mxu0 0.0
        %953 = vmatpush2.msra.mxu0 0.0
        %954 = vmatprep.subr.mxu0 0.0
        %955 = vmatpush2.msra.mxu0 0.0
        %956 = vmatprep.subr.mxu0 0.0
        %957 = vmatpush2.msra.mxu0 0.0
        %958 = vmatprep.subr.mxu0 0.0
        %959 = vmatpush2.msra.mxu0 0.0
        %960 = vmatprep.subr.mxu0 0.0
        %961 = vmatpush2.msra.mxu0 0.0
        %962 = vmatprep.subr.mxu0 0.0
        %963 = vmatpush2.msra.mxu0 0.0
        %964 = vmatprep.subr.mxu0 0.0
        %965 = vmatpush2.msra.mxu0 0.0
        %966 = vmatprep.subr.mxu0 0.0
        %967 = vmatpush2.msra.mxu0 0.0
        %968 = vmatprep.subr.mxu0 0.0
        %969 = vmatpush2.msra.mxu0 0.0
        %970 = vmatprep.subr.mxu0 0.0
        %971 = vmatpush2.msra.mxu0 0.0
        %972 = vmatprep.subr.mxu0 0.0
        %973 = vmatpush2.msra.mxu0 0.0
        %974 = vmatprep.subr.mxu0 0.0
        %975 = vmatpush2.msra.mxu0 0.0
        %976 = vmatprep.subr.mxu0 0.0
        %977 = vmatpush2.msra.mxu0 0.0
        %978 = vmatprep.subr.mxu0 0.0
        %979 = vmatpush2.msra.mxu0 0.0
        %980 = vmatprep.mubr.f32.mxu0 0.0
        %981 = vmatmul.mubr.f32.gmra.mxu0 %v554
        %v982 = vpop.f32.mrf.mxu0
        %v983 = vadd.f32 %v914, %v982
        %v984 = vpop.f32.mrf.mxu0
        %985 = vmatprep.mubr.f32.mxu0 0.0
        %986 = vmatmul.mubr.f32.gmra.mxu0 %v555
        %v987 = vpop.f32.mrf.mxu0
        %v988 = vadd.f32 %v914, %v987
        %v989 = vpop.f32.mrf.mxu0
        %990 = vdwg.mxu0
        %v991 = vmul.f32 %v983, %v444
        %v992 = vmul.f32 %v988, %v449
        %993 = vst [vmem:[%s426] sm:$0xff] %v991
        %994 = vst [vmem:[%s426 + $0x8] sm:$0xff] %v992
        %s995 = sand.u32 %s255, 1
        %s996 = scalar_lea.sflag [#allocation6], %s995
        %s997 = sand.u32 %s255, 1
        %s998 = smul.addr %s997, 16
        %s999 = scalar_lea.vmem [#allocation12], %s998
        // Predicated region
        $region84: #{tpu_custom_call.1} parent=59 // pred_check
          %p1000 = pneg %p265
        $region85: #{tpu_custom_call.1} parent=59 // pred_check_branch
          %1002 = sbr.rel (%p1000) target = $region87
        $region86: #{tpu_custom_call.1} parent=59 // pred_region
          %s1004 = ssub.s32 256, 256
          %1005 = vsyncadd %s996, %s1004
          %s1006 = smul.addr %s27, 2
          %s1007 = smul.addr %s1006, 128
          %s1008 = scalar_lea.hbm %s10, %s1007
          %s1009 = sshll.u32 %s999, 4
          %s1010 = int_to_ptr.vmem [resolvable:$true] %s1009
          %1015 = dma.vmem_to_hbm [thread:$0]  %s1010, 256, %s1008, %s996, 128, 128, 8
        $region87: #{tpu_custom_call.1} parent=59 // pred_fallthru
          _
      $region60: #{tpu_custom_call.1} parent=5 // pred_fallthru
        _
      %p1016 = scmp.le.s32.totalorder 2, %s22
      // Predicated region
      $region88: #{tpu_custom_call.1} parent=5 // pred_check
        %p1017 = pneg %p1016
      $region89: #{tpu_custom_call.1} parent=5 // pred_check_branch
        %1019 = sbr.rel (%p1017) target = $region91
      $region90: #{tpu_custom_call.1} parent=5 // pred_region
        %s1020 = ssub.s32 %s22, 2
        // Predicated region
        $region92: #{tpu_custom_call.1} parent=90 // pred_check
          %p1021 = pneg %p271
        $region93: #{tpu_custom_call.1} parent=90 // pred_check_branch
          %1023 = sbr.rel (%p1021) target = $region95
        $region94: #{tpu_custom_call.1} parent=90 // pred_region
          %s1024 = sand.u32 %s256, 1
          %s1025 = scalar_lea.sflag [#allocation6], %s1024
          %s1026 = sand.u32 %s256, 1
          %s1027 = smul.addr %s1026, 16
          %s1028 = scalar_lea.vmem [#allocation12], %s1027
          %1029 = dma.done %s1025, 256
        $region95: #{tpu_custom_call.1} parent=90 // pred_fallthru
          _
      $region91: #{tpu_custom_call.1} parent=5 // pred_fallthru
        _
    $region6: #{tpu_custom_call.1} parent=1 // loop_footer
      %s26 = sadd.s32 1, %s22
    $region7: #{tpu_custom_call.1} parent=1 // loop_footer_branch
      %21 = sbr.rel target = $region3
    $region8: #{tpu_custom_call.1} parent=1 // loop_exit
      _
    %1030 = vsyncpa [#allocation5], 1
    %s1031 = scalar_lea.sflag [#allocation5], 1
    %1032 = vsyncpa %s1031, 1
    %1033 = vsyncpa [#allocation8], 1
    %1034 = vsyncpa [#allocation11], 1
    %1035 = vsyncpa [#allocation6], 1
    %s1036 = scalar_lea.sflag [#allocation6], 1
    %1037 = vsyncpa %s1036, 1

</llo_original>
